<compile_context>
chip_gen: v5e
topology: v5e:2x2
jax: 0.10.0
libtpu: 0.0.40
codegen_flags: <defaults>
</compile_context>

<pallas_src>
import functools

import jax
import jax.numpy as jnp
from jax.experimental import pallas as pl
from jax.experimental.pallas import tpu as pltpu


def _round_up(v, m):
    return (v + m - 1) // m * m


def _gated_attn_kernel(x_ref, wab_ref, bab_ref, wcp_ref, bc_ref, A_ref, *, D, C):
    x = x_ref[...]
    if x.dtype != jnp.bfloat16:
        x = x.astype(jnp.bfloat16)            # bf16 MXU operands, f32 accumulate

    # Fused attention_a / attention_b: one (tn, L) x (L, 2D) MXU pass.
    h = (jnp.dot(x, wab_ref[...], preferred_element_type=jnp.float32)
         + bab_ref[...])                      # (tn, 2D) f32

    a = jnp.tanh(h[:, :D])                    # EUP
    b = 0.5 * jnp.tanh(0.5 * h[:, D:]) + 0.5  # sigmoid via tanh: single EUP push
    ab = a * b                                # VPU, f32

    if C == 1:
        # attention_c with n_classes=1: VPU multiply + XLU lane reduction.
        # Keeps the MXU free and avoids a lane-sparse (D x 1) result pop.
        A = jnp.sum(ab * wcp_ref[...], axis=-1, keepdims=True) + bc_ref[...]
    else:
        A = (jnp.dot(ab, wcp_ref[...], preferred_element_type=jnp.float32)
             + bc_ref[...])

    A_ref[...] = A.astype(A_ref.dtype)


def prepare_params(wa, ba, wb, bb, wc, bc):
    """One-time parameter re-layout; hoisted out of the forward path.

    wa, wb: (L, D) pre-transposed linear weights; ba, bb: (D,)
    wc: (D, C) pre-transposed; bc: (C,)
    """
    L, D = wa.shape
    C = wc.shape[1]

    # Pad D to a multiple of 128 so the h[:, :D] / h[:, D:] split sits on a
    # lane-tile boundary (zero-padded hidden units contribute exactly 0 to A).
    Dp = _round_up(D, 128)
    if Dp != D:
        wa = jnp.pad(wa, ((0, 0), (0, Dp - D)))
        wb = jnp.pad(wb, ((0, 0), (0, Dp - D)))
        ba = jnp.pad(ba, (0, Dp - D))
        bb = jnp.pad(bb, (0, Dp - D))
        wc = jnp.pad(wc, ((0, Dp - D), (0, 0)))

    wab = jnp.concatenate([wa, wb], axis=1).astype(jnp.bfloat16)        # (L, 2Dp)
    bab = jnp.concatenate([ba, bb]).reshape(1, 2 * Dp).astype(jnp.float32)
    if C == 1:
        wcp = wc.reshape(1, Dp).astype(jnp.float32)   # row layout for VPU/XLU proj
    else:
        wcp = wc.astype(jnp.float32)                  # (Dp, C) for MXU proj
    bc2 = bc.reshape(1, C).astype(jnp.float32)

    return {"wab": wab, "bab": bab, "wcp": wcp, "bc": bc2,
            "L": L, "D": Dp, "C": C}


def attn_net_gated(x, params, *, tn=1024):
    """Attn_Net_Gated forward.  x: (N, L).  Returns (A, x); x is a pure
    identity output and is returned from the wrapper (no in-kernel writeback)."""
    N, L = x.shape
    assert L == params["L"], (L, params["L"])
    Dp, C = params["D"], params["C"]
    wab, bab, wcp, bc2 = params["wab"], params["bab"], params["wcp"], params["bc"]

    # --- Row tiling -------------------------------------------------------
    x_bytes = jnp.dtype(x.dtype).itemsize
    tn = max(8, tn - tn % 8)
    # Cap the x double-buffer at ~32 MiB so the tile also fits v7x's 64 MiB VMEM.
    max_tile_rows = max(8, ((32 << 20) // (2 * L * x_bytes)) // 8 * 8)
    tn = min(tn, max_tile_rows)
    if N <= 8:
        tn_eff = N                                  # single block == full dim
    else:
        # Ensure >= 2 grid steps so "parallel" splits rows across v7x's 2 TCs.
        tn_eff = min(tn, _round_up((N + 1) // 2, 8))
    grid = (pl.cdiv(N, tn_eff),)                    # partial last block; no pad

    # --- VMEM budget: double-buffered x/A tiles + resident weights ---------
    vmem_bytes = (2 * tn_eff * L * x_bytes
                  + 2 * tn_eff * C * 4
                  + 2 * (wab.size * 2 + bab.size * 4 + wcp.size * 4 + bc2.size * 4)
                  + (4 << 20))
    vmem_bytes = int(min(max(vmem_bytes, 16 << 20), 48 << 20))

    kernel = functools.partial(_gated_attn_kernel, D=Dp, C=C)

    A = pl.pallas_call(
        kernel,
        out_shape=jax.ShapeDtypeStruct((N, C), jnp.float32),
        grid_spec=pltpu.PrefetchScalarGridSpec(
            num_scalar_prefetch=0,
            grid=grid,
            in_specs=[
                pl.BlockSpec((tn_eff, L), lambda i: (i, 0)),   # x tile (streamed)
                pl.BlockSpec(wab.shape, lambda i: (0, 0)),     # fused Wab (bf16)
                pl.BlockSpec(bab.shape, lambda i: (0, 0)),     # fused bias
                pl.BlockSpec(wcp.shape, lambda i: (0, 0)),     # Wc (row or (D,C))
                pl.BlockSpec(bc2.shape, lambda i: (0, 0)),     # bc
            ],
            out_specs=pl.BlockSpec((tn_eff, C), lambda i: (i, 0)),
        ),
        compiler_params=pltpu.CompilerParams(
            dimension_semantics=("parallel",),
            vmem_limit_bytes=vmem_bytes),
    )(x, wab, bab, wcp, bc2)

    return A, x   # x pass-through handled in the wrapper (pure identity)


def reference(x, wa, ba, wb, bb, wc, bc):
    a = jnp.tanh(x @ wa + ba)
    b = jax.nn.sigmoid(x @ wb + bb)
    A = (a * b) @ wc + bc
    return A, x


if __name__ == "__main__":
    # Small shapes consistent with the module (L input feats, D hidden).
    # N=50 deliberately exercises the partial last block + 2-step grid path.
    N, L, D = 50, 256, 128

    key = jax.random.PRNGKey(0)
    kx, kwa, kba, kwb, kbb, kwc, kbc = jax.random.split(key, 7)

    x = jax.random.normal(kx, (N, L), dtype=jnp.float32)
    wa = jax.random.normal(kwa, (L, D), dtype=jnp.float32) * 0.05
    ba = jax.random.normal(kba, (D,), dtype=jnp.float32) * 0.05
    wb = jax.random.normal(kwb, (L, D), dtype=jnp.float32) * 0.05
    bb = jax.random.normal(kbb, (D,), dtype=jnp.float32) * 0.05

    ok = True
    for C in (1, 2):   # n_classes=1 (VPU/XLU projection) and C>1 (MXU projection)
        wc = jax.random.normal(kwc, (D, C), dtype=jnp.float32) * 0.05
        bc = jax.random.normal(kbc, (C,), dtype=jnp.float32) * 0.05

        params = prepare_params(wa, ba, wb, bb, wc, bc)   # hoisted, done once
        A, x_out = attn_net_gated(x, params)
        jax.block_until_ready((A, x_out))

        A_ref, x_ref_out = reference(x, wa, ba, wb, bb, wc, bc)
        assert A.shape == (N, C) and x_out.shape == (N, L)
        # bf16 MXU operands (f32 accumulation) -> looser tolerance than pure f32.
        ok &= bool(jnp.allclose(A, A_ref, atol=2e-2, rtol=2e-2))
        ok &= bool(jnp.array_equal(x_out, x_ref_out))

    assert ok
    # TODO(synk): optional dropout branch of the module (training-time only)
    # is not implemented; forward here matches eval-mode semantics.
    print("KERNEL_OK")
</pallas_src>

<mosaic_0001>
module attributes {stable_mosaic.version = 11 : i64} {
  func.func @_gated_attn_kernel(%arg0: i32, %arg1: memref<32x256xf32, #tpu.memory_space<vmem>>, %arg2: memref<256x256xbf16, #tpu.memory_space<vmem>>, %arg3: memref<1x256xf32, #tpu.memory_space<vmem>>, %arg4: memref<1x128xf32, #tpu.memory_space<vmem>>, %arg5: memref<1x1xf32, #tpu.memory_space<vmem>>, %arg6: memref<32x1xf32, #tpu.memory_space<vmem>>) attributes {dimension_semantics = [#tpu.dimension_semantics<parallel>], iteration_bounds = array<i64: 2>, scalar_prefetch = 0 : i64, scratch_operands = 0 : i64, tpu.core_type = #tpu.core_type<tc>, window_params = [{transform_indices = @transform_0, window_bounds = array<i64: 32, 256>}, {pipeline_mode = #tpu.pipeline_mode<synchronous>, transform_indices = @transform_1, window_bounds = array<i64: 256, 256>}, {pipeline_mode = #tpu.pipeline_mode<synchronous>, transform_indices = @transform_2, window_bounds = array<i64: 1, 256>}, {pipeline_mode = #tpu.pipeline_mode<synchronous>, transform_indices = @transform_3, window_bounds = array<i64: 1, 128>}, {pipeline_mode = #tpu.pipeline_mode<synchronous>, transform_indices = @transform_4, window_bounds = array<i64: 1, 1>}, {transform_indices = @transform_5, window_bounds = array<i64: 32, 1>}]} {
    %c0 = arith.constant 0 : index
    %c0_0 = arith.constant 0 : index
    %0 = vector.load %arg1[%c0, %c0_0] : memref<32x256xf32, #tpu.memory_space<vmem>>, vector<32x256xf32>
    %1 = arith.truncf %0 : vector<32x256xf32> to vector<32x256xbf16>
    %c0_1 = arith.constant 0 : index
    %c0_2 = arith.constant 0 : index
    %2 = vector.load %arg2[%c0_1, %c0_2] : memref<256x256xbf16, #tpu.memory_space<vmem>>, vector<256x256xbf16>
    %cst = arith.constant dense<0.000000e+00> : vector<32x256xf32>
    %3 = tpu.matmul %1, %2, %cst {dimension_numbers = #tpu.dot_dimension_numbers<[1], [0], [0], [1], [0, 0, 1, 1], [], []>} : vector<32x256xbf16>, vector<256x256xbf16>, vector<32x256xf32> -> vector<32x256xf32>
    %c0_3 = arith.constant 0 : index
    %c0_4 = arith.constant 0 : index
    %4 = vector.load %arg3[%c0_3, %c0_4] : memref<1x256xf32, #tpu.memory_space<vmem>>, vector<1x256xf32>
    %5 = vector.broadcast %4 : vector<1x256xf32> to vector<32x256xf32>
    %6 = arith.addf %3, %5 : vector<32x256xf32>
    %7 = vector.extract_strided_slice %6 {offsets = [0, 0], sizes = [32, 128], strides = [1, 1]} : vector<32x256xf32> to vector<32x128xf32>
    %8 = math.tanh %7 : vector<32x128xf32>
    %9 = vector.extract_strided_slice %6 {offsets = [0, 128], sizes = [32, 128], strides = [1, 1]} : vector<32x256xf32> to vector<32x128xf32>
    %cst_5 = arith.constant 5.000000e-01 : f32
    %10 = vector.broadcast %cst_5 : f32 to vector<32x128xf32>
    %11 = arith.mulf %10, %9 : vector<32x128xf32>
    %12 = math.tanh %11 : vector<32x128xf32>
    %cst_6 = arith.constant 5.000000e-01 : f32
    %13 = vector.broadcast %cst_6 : f32 to vector<32x128xf32>
    %14 = arith.mulf %13, %12 : vector<32x128xf32>
    %cst_7 = arith.constant 5.000000e-01 : f32
    %15 = vector.broadcast %cst_7 : f32 to vector<32x128xf32>
    %16 = arith.addf %14, %15 : vector<32x128xf32>
    %17 = arith.mulf %8, %16 : vector<32x128xf32>
    %c0_8 = arith.constant 0 : index
    %c0_9 = arith.constant 0 : index
    %18 = vector.load %arg4[%c0_8, %c0_9] : memref<1x128xf32, #tpu.memory_space<vmem>>, vector<1x128xf32>
    %19 = vector.broadcast %18 : vector<1x128xf32> to vector<32x128xf32>
    %20 = arith.mulf %17, %19 : vector<32x128xf32>
    %cst_10 = arith.constant dense<0.000000e+00> : vector<32xf32>
    %21 = vector.multi_reduction <add>, %20, %cst_10 [1] : vector<32x128xf32> to vector<32xf32>
    %22 = vector.shape_cast %21 : vector<32xf32> to vector<32x1xf32>
    %c0_11 = arith.constant 0 : index
    %c0_12 = arith.constant 0 : index
    %23 = vector.load %arg5[%c0_11, %c0_12] : memref<1x1xf32, #tpu.memory_space<vmem>>, vector<1x1xf32>
    %24 = vector.broadcast %23 : vector<1x1xf32> to vector<32x1xf32>
    %25 = arith.addf %22, %24 : vector<32x1xf32>
    %c0_13 = arith.constant 0 : index
    %c0_14 = arith.constant 0 : index
    %26 = vector.load %arg6[%c0_13, %c0_14] : memref<32x1xf32, #tpu.memory_space<vmem>>, vector<32x1xf32>
    tpu.vector_store %arg6[%c0_13, %c0_14], %25 {strides = array<i32>} : memref<32x1xf32, #tpu.memory_space<vmem>>, vector<32x1xf32>,
    return
  }
  func.func @transform_0(%arg0: i32) -> (i32, i32) {
    %c0_i32 = arith.constant 0 : i32
    %c0_i32_0 = arith.constant 0 : i32
    return %arg0, %c0_i32 : i32, i32
  }
  func.func @transform_1(%arg0: i32) -> (i32, i32) {
    %c0_i32 = arith.constant 0 : i32
    %c0_i32_0 = arith.constant 0 : i32
    %c0_i32_1 = arith.constant 0 : i32
    return %c0_i32, %c0_i32_0 : i32, i32
  }
  func.func @transform_2(%arg0: i32) -> (i32, i32) {
    %c0_i32 = arith.constant 0 : i32
    %c0_i32_0 = arith.constant 0 : i32
    %c0_i32_1 = arith.constant 0 : i32
    return %c0_i32, %c0_i32_0 : i32, i32
  }
  func.func @transform_3(%arg0: i32) -> (i32, i32) {
    %c0_i32 = arith.constant 0 : i32
    %c0_i32_0 = arith.constant 0 : i32
    %c0_i32_1 = arith.constant 0 : i32
    return %c0_i32, %c0_i32_0 : i32, i32
  }
  func.func @transform_4(%arg0: i32) -> (i32, i32) {
    %c0_i32 = arith.constant 0 : i32
    %c0_i32_0 = arith.constant 0 : i32
    %c0_i32_1 = arith.constant 0 : i32
    return %c0_i32, %c0_i32_0 : i32, i32
  }
  func.func @transform_5(%arg0: i32) -> (i32, i32) {
    %c0_i32 = arith.constant 0 : i32
    %c0_i32_0 = arith.constant 0 : i32
    return %arg0, %c0_i32 : i32, i32
  }
}

</mosaic_0001>

<llo_original>
// kernel: tpu_custom_call.1
$region0: #{tpu_custom_call.1}
  #allocation0 [shape = 'u32[]', space=smem, size = 0x4, offset = 0x4, fixed_abs, tag = 'smem constant byte address 0x4 - core index']
  #allocation1 [shape = 'u32[72,128]{1,0:T(1,128)}', space=vmem, size = 0x9000, scoped, tag = 'internal scratch']
  #allocation2 [shape = 'f32[1,1]{1,0:T(1,128)S(1)}', space=vmem, size = 0x200, scoped, tag = 'scoped memory for tpu_custom_call.1']
  %s0 = inlined_call_operand.hbm [shape: f32[50,256], index: 0, kind: input, shape index: {}]
  %s1 = inlined_call_operand.hbm [shape: bf16[256,256], index: 1, kind: input, shape index: {}]
  %s2 = inlined_call_operand.vmem [shape: f32[1,256], index: 2, kind: input, shape index: {}]
  %s3 = inlined_call_operand.vmem [shape: f32[1,128], index: 3, kind: input, shape index: {}]
  %s4 = inlined_call_operand.<no memory space> [shape: f32[1,1], index: 4, kind: input, shape index: {}]
  %s5 = inlined_call_operand.vmem [shape: f32[50,1], index: 5, kind: output, shape index: {}]
  %s6 = sld [smem:[#allocation0]]
  $region109: #{tpu_custom_call.1} parent=0
    _
  %s8 = ssub.s32 1, %s6
  %s9 = scalar_select 0, %s8, %s6
  %v10 = vstv %s4
  %11 = vst [vmem:[#allocation2] sm:$0x1] %v10
  $region1: #{tpu_custom_call.1} parent=0
    #allocation3 [shape = 'u8[65536]{0}', space=vmem, size = 0x10000, scoped, tag = 'input window, operand 0']
    #allocation4 [shape = 's32[2]{0}', space=sflag, size = 0x8, scoped, tag = 'scoped memory for tpu_custom_call.1']
    #allocation5 [shape = 'u8[131072]{0}', space=vmem, size = 0x20000, scoped, tag = 'input window, operand 1, single buffered']
    #allocation6 [shape = 's32[1]{0}', space=sflag, size = 0x4, scoped, tag = 'scoped memory for tpu_custom_call.1']
    #allocation7 [shape = 'u8[32768]{0}', space=vmem, size = 0x8000, scoped, tag = 'output window, operand 0']
    %12 = vsyncpa [#allocation4], 0
    %s13 = scalar_lea.sflag [#allocation4], 1
    %14 = vsyncpa %s13, 0
    %15 = vsyncpa [#allocation6], 0
    loop: start=0, step=1, limit=4
    $region2: #{tpu_custom_call.1} parent=1 // loop_pre_header
      _
    $region3: #{tpu_custom_call.1} parent=1 // loop_header
      %s17 = sphi 0, %s21
      %p18 = scmp.ge.s32.totalorder %s17, 4
      %s27 = sphi 0, %s29
      %s30 = sphi 0, %s27
      %s31 = sphi 0, %s30
      %s47 = sphi 0, %s31
      %s51 = sphi 0, %s51
      %s53 = sphi 0, %s51
      %s54 = sphi 0, %s53
      %s68 = sphi 0, %s54
      %s72 = sphi 0, %s72
      %s74 = sphi 0, %s72
      %s75 = sphi 0, %s74
      %s89 = sphi 0, %s75
      %s93 = sphi 0, %s93
      %s95 = sphi 0, %s93
      %s96 = sphi 0, %s95
      %s110 = sphi 0, %s96
      %s114 = sphi 0, %s114
      %s116 = sphi 0, %s114
      %s117 = sphi 0, %s116
      %s131 = sphi 0, %s117
      %s137 = sphi 0, %s139
      %s140 = sphi 0, %s137
      %s141 = sphi 0, %s140
      %s157 = sphi 0, %s141
    $region4: #{tpu_custom_call.1} parent=1 // loop_header_branch
      %20 = sbr.rel (%p18) target = $region8
    $region5: #{tpu_custom_call.1} parent=1 // loop_body
      %s22 = ssub.s32 %s17, 1
      %s23 = ssub.s32 %s17, 2
      %s24 = sadd.s32 %s17, 1
      %s25 = ssub.s32 %s17, %s24
      %p26 = scmp.eq.s32.totalorder %s25, 0
      %s28 = sadd.s32 %s27, 1
      %s29 = scalar_select %p26, %s27, %s28
      %p32 = pneg %p26
      %p33 = scmp.eq.s32.totalorder %s17, 1
      %p34 = por %p32, %p33
      %p35 = scmp.ne.s32.totalorder %s27, %s30
      %p36 = scmp.eq.s32.totalorder %s17, 0
      %p37 = por %p35, %p36
      %p38 = scmp.ne.s32.totalorder %s27, %s30
      %p39 = scmp.eq.s32.totalorder %s22, 1
      %p40 = por %p38, %p39
      %p41 = scmp.ne.s32.totalorder %s30, %s31
      %p42 = scmp.eq.s32.totalorder %s22, 0
      %p43 = por %p41, %p42
      %p44 = scmp.ne.s32.totalorder %s30, %s31
      %p45 = scmp.eq.s32.totalorder %s23, 1
      %p46 = por %p44, %p45
      %p48 = scmp.ne.s32.totalorder %s31, %s47
      %p49 = scmp.eq.s32.totalorder %s23, 0
      %p50 = por %p48, %p49
      %s52 = sadd.s32 %s51, 1
      %p55 = scmp.eq.s32.totalorder %s17, 1
      %p56 = scmp.ne.s32.totalorder %s51, %s53
      %p57 = scmp.eq.s32.totalorder %s17, 0
      %p58 = por %p56, %p57
      %p59 = scmp.ne.s32.totalorder %s51, %s53
      %p60 = scmp.eq.s32.totalorder %s22, 1
      %p61 = por %p59, %p60
      %p62 = scmp.ne.s32.totalorder %s53, %s54
      %p63 = scmp.eq.s32.totalorder %s22, 0
      %p64 = por %p62, %p63
      %p65 = scmp.ne.s32.totalorder %s53, %s54
      %p66 = scmp.eq.s32.totalorder %s23, 1
      %p67 = por %p65, %p66
      %p69 = scmp.ne.s32.totalorder %s54, %s68
      %p70 = scmp.eq.s32.totalorder %s23, 0
      %p71 = por %p69, %p70
      %s73 = sadd.s32 %s72, 1
      %p76 = scmp.eq.s32.totalorder %s17, 1
      %p77 = scmp.ne.s32.totalorder %s72, %s74
      %p78 = scmp.eq.s32.totalorder %s17, 0
      %p79 = por %p77, %p78
      %p80 = scmp.ne.s32.totalorder %s72, %s74
      %p81 = scmp.eq.s32.totalorder %s22, 1
      %p82 = por %p80, %p81
      %p83 = scmp.ne.s32.totalorder %s74, %s75
      %p84 = scmp.eq.s32.totalorder %s22, 0
      %p85 = por %p83, %p84
      %p86 = scmp.ne.s32.totalorder %s74, %s75
      %p87 = scmp.eq.s32.totalorder %s23, 1
      %p88 = por %p86, %p87
      %p90 = scmp.ne.s32.totalorder %s75, %s89
      %p91 = scmp.eq.s32.totalorder %s23, 0
      %p92 = por %p90, %p91
      %s94 = sadd.s32 %s93, 1
      %p97 = scmp.eq.s32.totalorder %s17, 1
      %p98 = scmp.ne.s32.totalorder %s93, %s95
      %p99 = scmp.eq.s32.totalorder %s17, 0
      %p100 = por %p98, %p99
      %p101 = scmp.ne.s32.totalorder %s93, %s95
      %p102 = scmp.eq.s32.totalorder %s22, 1
      %p103 = por %p101, %p102
      %p104 = scmp.ne.s32.totalorder %s95, %s96
      %p105 = scmp.eq.s32.totalorder %s22, 0
      %p106 = por %p104, %p105
      %p107 = scmp.ne.s32.totalorder %s95, %s96
      %p108 = scmp.eq.s32.totalorder %s23, 1
      %p109 = por %p107, %p108
      %p111 = scmp.ne.s32.totalorder %s96, %s110
      %p112 = scmp.eq.s32.totalorder %s23, 0
      %p113 = por %p111, %p112
      %s115 = sadd.s32 %s114, 1
      %p118 = scmp.eq.s32.totalorder %s17, 1
      %p119 = scmp.ne.s32.totalorder %s114, %s116
      %p120 = scmp.eq.s32.totalorder %s17, 0
      %p121 = por %p119, %p120
      %p122 = scmp.ne.s32.totalorder %s114, %s116
      %p123 = scmp.eq.s32.totalorder %s22, 1
      %p124 = por %p122, %p123
      %p125 = scmp.ne.s32.totalorder %s116, %s117
      %p126 = scmp.eq.s32.totalorder %s22, 0
      %p127 = por %p125, %p126
      %p128 = scmp.ne.s32.totalorder %s116, %s117
      %p129 = scmp.eq.s32.totalorder %s23, 1
      %p130 = por %p128, %p129
      %p132 = scmp.ne.s32.totalorder %s117, %s131
      %p133 = scmp.eq.s32.totalorder %s23, 0
      %p134 = por %p132, %p133
      %s135 = ssub.s32 %s17, %s24
      %p136 = scmp.eq.s32.totalorder %s135, 0
      %s138 = sadd.s32 %s137, 1
      %s139 = scalar_select %p136, %s137, %s138
      %p142 = pneg %p136
      %p143 = scmp.eq.s32.totalorder %s17, 1
      %p144 = por %p142, %p143
      %p145 = scmp.ne.s32.totalorder %s137, %s140
      %p146 = scmp.eq.s32.totalorder %s17, 0
      %p147 = por %p145, %p146
      %p148 = scmp.ne.s32.totalorder %s137, %s140
      %p149 = scmp.eq.s32.totalorder %s22, 1
      %p150 = por %p148, %p149
      %p151 = scmp.ne.s32.totalorder %s140, %s141
      %p152 = scmp.eq.s32.totalorder %s22, 0
      %p153 = por %p151, %p152
      %p154 = scmp.ne.s32.totalorder %s140, %s141
      %p155 = scmp.eq.s32.totalorder %s23, 1
      %p156 = por %p154, %p155
      %p158 = scmp.ne.s32.totalorder %s141, %s157
      %p159 = scmp.eq.s32.totalorder %s23, 0
      %p160 = por %p158, %p159
      %p161 = scmp.le.s32.totalorder 1, %s17
      %p162 = scmp.lt.s32.totalorder %s17, 3
      %p163 = pnand %p161, %p162
      %p164 = pneg %p163
      // Predicated region
      $region9: #{tpu_custom_call.1} parent=5 // pred_check
        _
      $region10: #{tpu_custom_call.1} parent=5 // pred_check_branch
        %166 = sbr.rel (%p163) target = $region12
      $region11: #{tpu_custom_call.1} parent=5 // pred_region
        %s167 = ssub.s32 %s17, 1
        // Predicated region
        $region13: #{tpu_custom_call.1} parent=11 // pred_check
          %p168 = pneg %p64
        $region14: #{tpu_custom_call.1} parent=11 // pred_check_branch
          %170 = sbr.rel (%p168) target = $region16
        $region15: #{tpu_custom_call.1} parent=11 // pred_region
          %172 = vsyncadd [#allocation6], 0
          %s173 = sshll.u32 %s1, 4
          %s174 = int_to_ptr.hbm [resolvable:$true] %s173
          %s175 = sshll.u32 [#allocation5], 4
          %s176 = int_to_ptr.vmem [resolvable:$true] %s175
          %181 = dma.hbm_to_vmem [thread:$0]  %s174, 4096, %s176, [#allocation6], 128, 128, 8
        $region16: #{tpu_custom_call.1} parent=11 // pred_fallthru
          _
        // Predicated region
        $region17: #{tpu_custom_call.1} parent=11 // pred_check
          %p182 = pneg %p85
        $region18: #{tpu_custom_call.1} parent=11 // pred_check_branch
          %184 = sbr.rel (%p182) target = $region20
        $region19: #{tpu_custom_call.1} parent=11 // pred_region
          _
        $region20: #{tpu_custom_call.1} parent=11 // pred_fallthru
          _
        // Predicated region
        $region21: #{tpu_custom_call.1} parent=11 // pred_check
          %p185 = pneg %p106
        $region22: #{tpu_custom_call.1} parent=11 // pred_check_branch
          %187 = sbr.rel (%p185) target = $region24
        $region23: #{tpu_custom_call.1} parent=11 // pred_region
          _
        $region24: #{tpu_custom_call.1} parent=11 // pred_fallthru
          _
        // Predicated region
        $region25: #{tpu_custom_call.1} parent=11 // pred_check
          %p188 = pneg %p127
        $region26: #{tpu_custom_call.1} parent=11 // pred_check_branch
          %190 = sbr.rel (%p188) target = $region28
        $region27: #{tpu_custom_call.1} parent=11 // pred_region
          _
        $region28: #{tpu_custom_call.1} parent=11 // pred_fallthru
          _
      $region12: #{tpu_custom_call.1} parent=5 // pred_fallthru
        _
      %p191 = scmp.lt.s32.totalorder %s17, 2
      // Predicated region
      $region29: #{tpu_custom_call.1} parent=5 // pred_check
        %p192 = pneg %p191
      $region30: #{tpu_custom_call.1} parent=5 // pred_check_branch
        %194 = sbr.rel (%p192) target = $region32
      $region31: #{tpu_custom_call.1} parent=5 // pred_region
        // Predicated region
        $region33: #{tpu_custom_call.1} parent=31 // pred_check
          %p195 = pneg %p37
        $region34: #{tpu_custom_call.1} parent=31 // pred_check_branch
          %197 = sbr.rel (%p195) target = $region36
        $region35: #{tpu_custom_call.1} parent=31 // pred_region
          %s198 = sand.u32 %s27, 1
          %s199 = scalar_lea.sflag [#allocation4], %s198
          %s200 = sand.u32 %s27, 1
          %s201 = smul.addr %s200, 64
          %s202 = scalar_lea.vmem [#allocation3], %s201
          %s203 = smul.u32 4, %s17
          %s204 = ssub.s32 7, %s203
          %p205 = scmp.lt.s32.totalorder %s204, 4
          %s206 = scalar_select %p205, %s204, 4
          %s207 = smul.u32 8, %s206
          %s208 = smul.u32 %s207, 2
          %s209 = ssub.s32 64, %s208
          %s210 = sshll.u32 %s209, 4
          %211 = vsyncadd %s199, %s210
          %p212 = scmp.ne.s32.totalorder 0, %s208
          %s213 = smul.addr %s203, 2
          %s214 = smul.addr %s213, 8
          %s215 = scalar_lea.hbm %s0, %s214
          %s216 = smul.u32 16, %s206
          %s217 = sshll.u32 %s215, 4
          %s218 = int_to_ptr.hbm [resolvable:$true] %s217
          %s219 = sshll.u32 %s202, 4
          %s220 = int_to_ptr.vmem [resolvable:$true] %s219
          %s221 = sshll.u32 %s216, 4
          %225 = dma.hbm_to_vmem [thread:$0]  (%p212), %s218, %s221, %s220, %s199, 256, 256, 16
        $region36: #{tpu_custom_call.1} parent=31 // pred_fallthru
          _
      $region32: #{tpu_custom_call.1} parent=5 // pred_fallthru
        _
      %p226 = scmp.le.s32.totalorder 1, %s17
      %p227 = scmp.lt.s32.totalorder %s17, 3
      %p228 = pnand %p226, %p227
      %p229 = pneg %p228
      // Predicated region
      $region37: #{tpu_custom_call.1} parent=5 // pred_check
        _
      $region38: #{tpu_custom_call.1} parent=5 // pred_check_branch
        %231 = sbr.rel (%p228) target = $region40
      $region39: #{tpu_custom_call.1} parent=5 // pred_region
        %s232 = ssub.s32 %s17, 1
        %s233 = sand.u32 %s30, 1
        %s234 = scalar_lea.sflag [#allocation4], %s233
        %s235 = sand.u32 %s30, 1
        %s236 = smul.addr %s235, 64
        %s237 = scalar_lea.vmem [#allocation3], %s236
        // Predicated region
        $region41: #{tpu_custom_call.1} parent=39 // pred_check
          %p238 = pneg %p43
        $region42: #{tpu_custom_call.1} parent=39 // pred_check_branch
          %240 = sbr.rel (%p238) target = $region44
        $region43: #{tpu_custom_call.1} parent=39 // pred_region
          %242 = dma.done %s234, 1024
        $region44: #{tpu_custom_call.1} parent=39 // pred_fallthru
          _
        // Predicated region
        $region45: #{tpu_custom_call.1} parent=39 // pred_check
          %p243 = pneg %p64
        $region46: #{tpu_custom_call.1} parent=39 // pred_check_branch
          %245 = sbr.rel (%p243) target = $region48
        $region47: #{tpu_custom_call.1} parent=39 // pred_region
          %247 = dma.done [#allocation6], 4096
        $region48: #{tpu_custom_call.1} parent=39 // pred_fallthru
          _
        %s248 = sand.u32 %s30, 1
        %s249 = scalar_lea.sflag [#allocation4], %s248
        %s250 = sand.u32 %s30, 1
        %s251 = smul.addr %s250, 64
        %s252 = scalar_lea.vmem [#allocation3], %s251
        %p253 = pneg %p43
        %p254 = pneg %p40
        %p255 = pneg %p64
        %p256 = pneg %p61
        %p257 = pneg %p85
        %p258 = pneg %p82
        %p259 = pneg %p106
        %p260 = pneg %p103
        %p261 = pneg %p127
        %p262 = pneg %p124
        %p263 = pneg %p153
        %p264 = pneg %p150
        %s265 = sand.u32 %s140, 1
        %s266 = sand.u32 %s140, 1
        %s267 = smul.addr %s266, 32
        %s268 = scalar_lea.vmem [#allocation7], %s267
        %s269 = smul.u32 4, %s22
        %s270 = ssub.s32 7, %s269
        %p271 = scmp.lt.s32.totalorder %s270, 4
        %s272 = scalar_select %p271, %s270, 4
        %s273 = smul.u32 8, %s272
        %s274 = smul.u32 %s273, 2
        %s275 = smul.u32 4, %s22
        %s276 = ssub.s32 7, %s275
        %p277 = scmp.lt.s32.totalorder %s276, 4
        %s278 = scalar_select %p277, %s276, 4
        %s279 = smul.u32 8, %s278
        %v280 = vld [vmem:[%s237] sm:$0xff]
        %v281 = vld [vmem:[%s237 + $0x8] sm:$0xff]
        %v282 = vld [vmem:[%s237 + $0x10] sm:$0xff]
        %v283 = vld [vmem:[%s237 + $0x18] sm:$0xff]
        %v284 = vld [vmem:[%s237 + $0x20] sm:$0xff]
        %v285 = vld [vmem:[%s237 + $0x28] sm:$0xff]
        %v286 = vld [vmem:[%s237 + $0x30] sm:$0xff]
        %v287 = vld [vmem:[%s237 + $0x38] sm:$0xff]
        %v288 = vpack.c.bf16 %v282, %v280
        %v289 = vpack.c.bf16 %v283, %v281
        %v290 = vpack.c.bf16 %v286, %v284
        %v291 = vpack.c.bf16 %v287, %v285
        %v292 = vld [vmem:[#allocation5] sm:$0xff]
        %v293 = vld [vmem:[#allocation5 + $0x8] sm:$0xff]
        %v294 = vld [vmem:[#allocation5 + $0x10] sm:$0xff]
        %v295 = vld [vmem:[#allocation5 + $0x18] sm:$0xff]
        %v296 = vld [vmem:[#allocation5 + $0x20] sm:$0xff]
        %v297 = vld [vmem:[#allocation5 + $0x28] sm:$0xff]
        %v298 = vld [vmem:[#allocation5 + $0x30] sm:$0xff]
        %v299 = vld [vmem:[#allocation5 + $0x38] sm:$0xff]
        %v300 = vld [vmem:[#allocation5 + $0x40] sm:$0xff]
        %v301 = vld [vmem:[#allocation5 + $0x48] sm:$0xff]
        %v302 = vld [vmem:[#allocation5 + $0x50] sm:$0xff]
        %v303 = vld [vmem:[#allocation5 + $0x58] sm:$0xff]
        %v304 = vld [vmem:[#allocation5 + $0x60] sm:$0xff]
        %v305 = vld [vmem:[#allocation5 + $0x68] sm:$0xff]
        %v306 = vld [vmem:[#allocation5 + $0x70] sm:$0xff]
        %v307 = vld [vmem:[#allocation5 + $0x78] sm:$0xff]
        %v308 = vld [vmem:[#allocation5 + $0x80] sm:$0xff]
        %v309 = vld [vmem:[#allocation5 + $0x88] sm:$0xff]
        %v310 = vld [vmem:[#allocation5 + $0x90] sm:$0xff]
        %v311 = vld [vmem:[#allocation5 + $0x98] sm:$0xff]
        %v312 = vld [vmem:[#allocation5 + $0xa0] sm:$0xff]
        %v313 = vld [vmem:[#allocation5 + $0xa8] sm:$0xff]
        %v314 = vld [vmem:[#allocation5 + $0xb0] sm:$0xff]
        %v315 = vld [vmem:[#allocation5 + $0xb8] sm:$0xff]
        %v316 = vld [vmem:[#allocation5 + $0xc0] sm:$0xff]
        %v317 = vld [vmem:[#allocation5 + $0xc8] sm:$0xff]
        %v318 = vld [vmem:[#allocation5 + $0xd0] sm:$0xff]
        %v319 = vld [vmem:[#allocation5 + $0xd8] sm:$0xff]
        %v320 = vld [vmem:[#allocation5 + $0xe0] sm:$0xff]
        %v321 = vld [vmem:[#allocation5 + $0xe8] sm:$0xff]
        %v322 = vld [vmem:[#allocation5 + $0xf0] sm:$0xff]
        %v323 = vld [vmem:[#allocation5 + $0xf8] sm:$0xff]
        %v324 = vld [vmem:[%s2] sm:$0x3]
        %v326 = vperm.slane %v324, 0
        %v327 = vperm.slane %v324, 1
        %v362 = vunpack.c.l.b16 %v292
        %v363 = vunpack.c.h.b16 %v292
        %v364 = vunpack.c.l.b16 %v293
        %v365 = vunpack.c.h.b16 %v293
        %v366 = vunpack.c.l.b16 %v294
        %v367 = vunpack.c.h.b16 %v294
        %v368 = vunpack.c.l.b16 %v295
        %v369 = vunpack.c.h.b16 %v295
        %v370 = vunpack.c.l.b16 %v296
        %v371 = vunpack.c.h.b16 %v296
        %v372 = vunpack.c.l.b16 %v297
        %v373 = vunpack.c.h.b16 %v297
        %v374 = vunpack.c.l.b16 %v298
        %v375 = vunpack.c.h.b16 %v298
        %v376 = vunpack.c.l.b16 %v299
        %v377 = vunpack.c.h.b16 %v299
        %v378 = vunpack.c.l.b16 %v300
        %v379 = vunpack.c.h.b16 %v300
        %v380 = vunpack.c.l.b16 %v301
        %v381 = vunpack.c.h.b16 %v301
        %v382 = vunpack.c.l.b16 %v302
        %v383 = vunpack.c.h.b16 %v302
        %v384 = vunpack.c.l.b16 %v303
        %v385 = vunpack.c.h.b16 %v303
        %v386 = vunpack.c.l.b16 %v304
        %v387 = vunpack.c.h.b16 %v304
        %v388 = vunpack.c.l.b16 %v305
        %v389 = vunpack.c.h.b16 %v305
        %v390 = vunpack.c.l.b16 %v306
        %v391 = vunpack.c.h.b16 %v306
        %v392 = vunpack.c.l.b16 %v307
        %v393 = vunpack.c.h.b16 %v307
        %v394 = vunpack.c.l.b16 %v308
        %v395 = vunpack.c.h.b16 %v308
        %v396 = vunpack.c.l.b16 %v309
        %v397 = vunpack.c.h.b16 %v309
        %v398 = vunpack.c.l.b16 %v310
        %v399 = vunpack.c.h.b16 %v310
        %v400 = vunpack.c.l.b16 %v311
        %v401 = vunpack.c.h.b16 %v311
        %v402 = vunpack.c.l.b16 %v312
        %v403 = vunpack.c.h.b16 %v312
        %v404 = vunpack.c.l.b16 %v313
        %v405 = vunpack.c.h.b16 %v313
        %v406 = vunpack.c.l.b16 %v314
        %v407 = vunpack.c.h.b16 %v314
        %v408 = vunpack.c.l.b16 %v315
        %v409 = vunpack.c.h.b16 %v315
        %v410 = vunpack.c.l.b16 %v316
        %v411 = vunpack.c.h.b16 %v316
        %v412 = vunpack.c.l.b16 %v317
        %v413 = vunpack.c.h.b16 %v317
        %v414 = vunpack.c.l.b16 %v318
        %v415 = vunpack.c.h.b16 %v318
        %v416 = vunpack.c.l.b16 %v319
        %v417 = vunpack.c.h.b16 %v319
        %v418 = vunpack.c.l.b16 %v320
        %v419 = vunpack.c.h.b16 %v320
        %v420 = vunpack.c.l.b16 %v321
        %v421 = vunpack.c.h.b16 %v321
        %v422 = vunpack.c.l.b16 %v322
        %v423 = vunpack.c.h.b16 %v322
        %v424 = vunpack.c.l.b16 %v323
        %v425 = vunpack.c.h.b16 %v323
        %v426 = vpack.c.b16 %v364, %v362
        %v427 = vpack.c.b16 %v365, %v363
        %v428 = vpack.c.b16 %v368, %v366
        %v429 = vpack.c.b16 %v369, %v367
        %v430 = vpack.c.b16 %v372, %v370
        %v431 = vpack.c.b16 %v373, %v371
        %v432 = vpack.c.b16 %v376, %v374
        %v433 = vpack.c.b16 %v377, %v375
        %v434 = vpack.c.b16 %v380, %v378
        %v435 = vpack.c.b16 %v381, %v379
        %v436 = vpack.c.b16 %v384, %v382
        %v437 = vpack.c.b16 %v385, %v383
        %v438 = vpack.c.b16 %v388, %v386
        %v439 = vpack.c.b16 %v389, %v387
        %v440 = vpack.c.b16 %v392, %v390
        %v441 = vpack.c.b16 %v393, %v391
        %v442 = vpack.c.b16 %v396, %v394
        %v443 = vpack.c.b16 %v397, %v395
        %v444 = vpack.c.b16 %v400, %v398
        %v445 = vpack.c.b16 %v401, %v399
        %v446 = vpack.c.b16 %v404, %v402
        %v447 = vpack.c.b16 %v405, %v403
        %v448 = vpack.c.b16 %v408, %v406
        %v449 = vpack.c.b16 %v409, %v407
        %v450 = vpack.c.b16 %v412, %v410
        %v451 = vpack.c.b16 %v413, %v411
        %v452 = vpack.c.b16 %v416, %v414
        %v453 = vpack.c.b16 %v417, %v415
        %v454 = vpack.c.b16 %v420, %v418
        %v455 = vpack.c.b16 %v421, %v419
        %v456 = vpack.c.b16 %v424, %v422
        %v457 = vpack.c.b16 %v425, %v423
        %490 = vmatpush.bf16.msra.mxu0 %v440
        %491 = vmatpush.bf16.msra.mxu0 %v438
        %492 = vmatpush.bf16.msra.mxu0 %v436
        %493 = vmatpush.bf16.msra.mxu0 %v434
        %494 = vmatpush.bf16.msra.mxu0 %v432
        %495 = vmatpush.bf16.msra.mxu0 %v430
        %496 = vmatpush.bf16.msra.mxu0 %v428
        %497 = vmatpush.bf16.msra.mxu0 %v426
        %498 = vmatmul.bf16.gmra.mxu0 %v288
        %v499 = vpop.f32.mrf.mxu0
        %v500 = vadd.f32 %v326, %v499
        %v501 = vpop.f32.mrf.mxu0
        %v502 = vadd.f32 %v326, %v501
        %503 = vmatmul.bf16.gmra.mxu0 %v290
        %v504 = vpop.f32.mrf.mxu0
        %v505 = vadd.f32 %v326, %v504
        %v506 = vpop.f32.mrf.mxu0
        %v507 = vadd.f32 %v326, %v506
        %508 = vdwg.mxu0
        %509 = vmatpush.bf16.msra.mxu0 %v456
        %510 = vmatpush.bf16.msra.mxu0 %v454
        %511 = vmatpush.bf16.msra.mxu0 %v452
        %512 = vmatpush.bf16.msra.mxu0 %v450
        %513 = vmatpush.bf16.msra.mxu0 %v448
        %514 = vmatpush.bf16.msra.mxu0 %v446
        %515 = vmatpush.bf16.msra.mxu0 %v444
        %516 = vmatpush.bf16.msra.mxu0 %v442
        %517 = vmatmul.bf16.gmra.mxu0 %v289
        %v518 = vpop.f32.mrf.mxu0
        %v519 = vadd.f32 %v500, %v518
        %v520 = vpop.f32.mrf.mxu0
        %v521 = vadd.f32 %v502, %v520
        %522 = vmatmul.bf16.gmra.mxu0 %v291
        %v523 = vpop.f32.mrf.mxu0
        %v524 = vadd.f32 %v505, %v523
        %v525 = vpop.f32.mrf.mxu0
        %v526 = vadd.f32 %v507, %v525
        %527 = vdwg.mxu0
        %528 = vmatpush.bf16.msra.mxu0 %v441
        %529 = vmatpush.bf16.msra.mxu0 %v439
        %530 = vmatpush.bf16.msra.mxu0 %v437
        %531 = vmatpush.bf16.msra.mxu0 %v435
        %532 = vmatpush.bf16.msra.mxu0 %v433
        %533 = vmatpush.bf16.msra.mxu0 %v431
        %534 = vmatpush.bf16.msra.mxu0 %v429
        %535 = vmatpush.bf16.msra.mxu0 %v427
        %536 = vmatmul.bf16.gmra.mxu0 %v288
        %v537 = vpop.f32.mrf.mxu0
        %v538 = vadd.f32 %v327, %v537
        %v539 = vpop.f32.mrf.mxu0
        %v540 = vadd.f32 %v327, %v539
        %541 = vmatmul.bf16.gmra.mxu0 %v290
        %v542 = vpop.f32.mrf.mxu0
        %v543 = vadd.f32 %v327, %v542
        %v544 = vpop.f32.mrf.mxu0
        %v545 = vadd.f32 %v327, %v544
        %546 = vdwg.mxu0
        %547 = vmatpush.bf16.msra.mxu0 %v457
        %548 = vmatpush.bf16.msra.mxu0 %v455
        %549 = vmatpush.bf16.msra.mxu0 %v453
        %550 = vmatpush.bf16.msra.mxu0 %v451
        %551 = vmatpush.bf16.msra.mxu0 %v449
        %552 = vmatpush.bf16.msra.mxu0 %v447
        %553 = vmatpush.bf16.msra.mxu0 %v445
        %554 = vmatpush.bf16.msra.mxu0 %v443
        %555 = vmatmul.bf16.gmra.mxu0 %v289
        %v556 = vpop.f32.mrf.mxu0
        %v557 = vadd.f32 %v538, %v556
        %v558 = vpop.f32.mrf.mxu0
        %v559 = vadd.f32 %v540, %v558
        %560 = vmatmul.bf16.gmra.mxu0 %v291
        %v561 = vpop.f32.mrf.mxu0
        %v562 = vadd.f32 %v543, %v561
        %v563 = vpop.f32.mrf.mxu0
        %v564 = vadd.f32 %v545, %v563
        %565 = vdwg.mxu0
        %v566 = vtanh.pop %v519
        %v567 = vtanh.pop %v521
        %v568 = vtanh.pop %v524
        %v569 = vtanh.pop %v526
        %v570 = vmul.f32 %v557, 0.5
        %v571 = vmul.f32 %v559, 0.5
        %v572 = vmul.f32 %v562, 0.5
        %v573 = vmul.f32 %v564, 0.5
        %v574 = vtanh.pop %v570
        %v575 = vtanh.pop %v571
        %v576 = vtanh.pop %v572
        %v577 = vtanh.pop %v573
        %v578 = vmul.f32 %v574, 0.5
        %v579 = vmul.f32 %v575, 0.5
        %v580 = vmul.f32 %v576, 0.5
        %v581 = vmul.f32 %v577, 0.5
        %v582 = vadd.f32 %v578, 0.5
        %v583 = vadd.f32 %v579, 0.5
        %v584 = vadd.f32 %v580, 0.5
        %v585 = vadd.f32 %v581, 0.5
        %v586 = vmul.f32 %v566, %v582
        %v587 = vmul.f32 %v567, %v583
        %v588 = vmul.f32 %v568, %v584
        %v589 = vmul.f32 %v569, %v585
        %v590 = vld [vmem:[%s3] sm:$0x1]
        %v592 = vperm.slane %v590, 0
        %v594 = vmul.f32 %v586, %v592
        %v595 = vmul.f32 %v587, %v592
        %v596 = vmul.f32 %v588, %v592
        %v597 = vmul.f32 %v589, %v592
        %598 = vadd.xlane.f32.xlu0 %v594
        %v599 = vpop.xlane.xlu0 %598
        %600 = vadd.xlane.f32.xlu0 %v595
        %v601 = vpop.xlane.xlu0 %600
        %602 = vadd.xlane.f32.xlu0 %v596
        %v603 = vpop.xlane.xlu0 %602
        %604 = vadd.xlane.f32.xlu0 %v597
        %v605 = vpop.xlane.xlu0 %604
        %v606 = vld [vmem:[#allocation2] sm:$0x1]
        %v608 = vperm.slane %v606, 0
        %v610 = vadd.f32 %v599, %v608
        %v611 = vadd.f32 %v601, %v608
        %v612 = vadd.f32 %v603, %v608
        %v613 = vadd.f32 %v605, %v608
        %vm614 = vcmask 7168
        %615 = vst.msk [vmem:[%s268] sm:$0xff] %vm614, %v610
        %616 = vst.msk [vmem:[%s268 + $0x8] sm:$0xff] %vm614, %v611
        %617 = vst.msk [vmem:[%s268 + $0x10] sm:$0xff] %vm614, %v612
        %618 = vst.msk [vmem:[%s268 + $0x18] sm:$0xff] %vm614, %v613
        %s619 = sand.u32 %s140, 1
        %s620 = sand.u32 %s140, 1
        %s621 = smul.addr %s620, 32
        %s622 = scalar_lea.vmem [#allocation7], %s621
        // Predicated region
        $region49: #{tpu_custom_call.1} parent=39 // pred_check
          %p623 = pneg %p150
        $region50: #{tpu_custom_call.1} parent=39 // pred_check_branch
          %625 = sbr.rel (%p623) target = $region52
        $region51: #{tpu_custom_call.1} parent=39 // pred_region
          %s626 = smul.u32 4, %s22
          %s627 = ssub.s32 7, %s626
          %p628 = scmp.lt.s32.totalorder %s627, 4
          %s629 = scalar_select %p628, %s627, 4
          %s630 = smul.u32 8, %s629
          %p631 = scmp.ne.s32.totalorder 0, %s630
          %s632 = smul.addr %s626, 8
          %s633 = scalar_lea.vmem %s5, %s632
          // Predicated region
          $region53: #{tpu_custom_call.1} parent=51 // pred_check
            %p634 = pneg %p631
          $region54: #{tpu_custom_call.1} parent=51 // pred_check_branch
            %636 = sbr.rel (%p634) target = $region56
          $region55: #{tpu_custom_call.1} parent=51 // pred_region
            // Predicated region
            $region57: #{tpu_custom_call.1} parent=55 // pred_check
              _
            $region58: #{tpu_custom_call.1} parent=55 // pred_check_branch
              %638 = sbr.rel (0) target = $region60
            $region59: #{tpu_custom_call.1} parent=55 // pred_region
              // Predicated region
              $region79: #{tpu_custom_call.1} parent=59 // pred_check
                _
              $region80: #{tpu_custom_call.1} parent=59 // pred_check_branch
                %694 = sbr.rel (0) target = $region82
              $region81: #{tpu_custom_call.1} parent=59 // pred_region
                %s695 = sshrl.u32 %s629, 2
                // While loop
                $region83: #{tpu_custom_call.1} parent=81 // loop_pre_header
                  _
                $region84: #{tpu_custom_call.1} parent=81 // loop_header
                  %s697 = sphi 0, %s699
                  %p698 = scmp.ge.s32.totalorder %s697, %s695
                  %s702 = sphi 0, %s715
                  %s703 = sphi %s622, %s718
                  %s704 = sphi %s633, %s719
                $region85: #{tpu_custom_call.1} parent=81 // loop_header_branch
                  %701 = sbr.rel (%p698) target = $region89
                $region86: #{tpu_custom_call.1} parent=81 // loop_body
                  %v705 = vld [vmem:[%s703] sm:$0xff]
                  %706 = vst [vmem:[%s704] sm:$0xff] %v705
                  %v707 = vld [vmem:[%s703 + $0x8] sm:$0xff]
                  %708 = vst [vmem:[%s704 + $0x8] sm:$0xff] %v707
                  %v709 = vld [vmem:[%s703 + $0x10] sm:$0xff]
                  %710 = vst [vmem:[%s704 + $0x10] sm:$0xff] %v709
                  %v711 = vld [vmem:[%s703 + $0x18] sm:$0xff]
                  %712 = vst [vmem:[%s704 + $0x18] sm:$0xff] %v711
                  %s713 = sadd.s32 1, %s702
                  %p714 = scmp.ge.s32.totalorder %s713, %s695
                  %s715 = scalar_select %p714, 0, %s713
                  %s716 = smul.u32 %s715, 32
                  %s717 = smul.u32 %s715, 32
                  %s718 = scalar_lea.vmem %s622, %s716 [#allocation7]
                  %s719 = scalar_lea.vmem %s633, %s717
                $region87: #{tpu_custom_call.1} parent=81 // loop_footer
                  %s699 = sadd.s32 %s697, 1
                $region88: #{tpu_custom_call.1} parent=81 // loop_footer_branch
                  %696 = sbr.rel target = $region84
                $region89: #{tpu_custom_call.1} parent=81 // loop_exit
                  _
                %s720 = sshrl.u32 %s629, 2
                %s721 = sand.u32 %s629, 3
                %s722 = smul.u32 %s720, 4
                %s723 = smul.u32 8, %s722
                %s724 = scalar_lea.vmem %s622, %s723 [#allocation7]
                %s725 = smul.u32 8, %s722
                %s726 = scalar_lea.vmem %s633, %s725
                // While loop
                $region90: #{tpu_custom_call.1} parent=81 // loop_pre_header
                  _
                $region91: #{tpu_custom_call.1} parent=81 // loop_header
                  %s728 = sphi 0, %s730
                  %p729 = scmp.ge.s32.totalorder %s728, %s721
                  %s733 = sphi 0, %s740
                  %s734 = sphi %s724, %s743
                  %s735 = sphi %s726, %s744
                $region92: #{tpu_custom_call.1} parent=81 // loop_header_branch
                  %732 = sbr.rel (%p729) target = $region96
                $region93: #{tpu_custom_call.1} parent=81 // loop_body
                  %v736 = vld [vmem:[%s734] sm:$0xff]
                  %737 = vst [vmem:[%s735] sm:$0xff] %v736
                  %s738 = sadd.s32 1, %s733
                  %p739 = scmp.ge.s32.totalorder %s738, %s721
                  %s740 = scalar_select %p739, 0, %s738
                  %s741 = smul.u32 %s740, 8
                  %s742 = smul.u32 %s740, 8
                  %s743 = scalar_lea.vmem %s724, %s741 [#allocation7]
                  %s744 = scalar_lea.vmem %s726, %s742
                $region94: #{tpu_custom_call.1} parent=81 // loop_footer
                  %s730 = sadd.s32 %s728, 1
                $region95: #{tpu_custom_call.1} parent=81 // loop_footer_branch
                  %727 = sbr.rel target = $region91
                $region96: #{tpu_custom_call.1} parent=81 // loop_exit
                  _
              $region82: #{tpu_custom_call.1} parent=59 // pred_fallthru
                _
              // Predicated region
              $region97: #{tpu_custom_call.1} parent=59 // pred_check
                _
              $region98: #{tpu_custom_call.1} parent=59 // pred_check_branch
                %746 = sbr.rel target = $region100
              $region99: #{tpu_custom_call.1} parent=59 // pred_region
                _
              $region100: #{tpu_custom_call.1} parent=59 // pred_fallthru
                _
            $region60: #{tpu_custom_call.1} parent=55 // pred_fallthru
              _
            // Predicated region
            $region61: #{tpu_custom_call.1} parent=55 // pred_check
              _
            $region62: #{tpu_custom_call.1} parent=55 // pred_check_branch
              %640 = sbr.rel target = $region64
            $region63: #{tpu_custom_call.1} parent=55 // pred_region
              %s642 = ssub.s32 256, 1
              %s643 = sshrl.u32 %s629, 2
              // While loop
              $region65: #{tpu_custom_call.1} parent=63 // loop_pre_header
                _
              $region66: #{tpu_custom_call.1} parent=63 // loop_header
                %s645 = sphi 0, %s647
                %p646 = scmp.ge.s32.totalorder %s645, %s643
                %s650 = sphi 0, %s663
                %s651 = sphi %s622, %s666
                %s652 = sphi %s633, %s667
              $region67: #{tpu_custom_call.1} parent=63 // loop_header_branch
                %649 = sbr.rel (%p646) target = $region71
              $region68: #{tpu_custom_call.1} parent=63 // loop_body
                %v653 = vld [vmem:[%s651] sm:%s642]
                %654 = vst [vmem:[%s652] sm:%s642] %v653
                %v655 = vld [vmem:[%s651 + $0x8] sm:%s642]
                %656 = vst [vmem:[%s652 + $0x8] sm:%s642] %v655
                %v657 = vld [vmem:[%s651 + $0x10] sm:%s642]
                %658 = vst [vmem:[%s652 + $0x10] sm:%s642] %v657
                %v659 = vld [vmem:[%s651 + $0x18] sm:%s642]
                %660 = vst [vmem:[%s652 + $0x18] sm:%s642] %v659
                %s661 = sadd.s32 1, %s650
                %p662 = scmp.ge.s32.totalorder %s661, %s643
                %s663 = scalar_select %p662, 0, %s661
                %s664 = smul.u32 %s663, 32
                %s665 = smul.u32 %s663, 32
                %s666 = scalar_lea.vmem %s622, %s664 [#allocation7]
                %s667 = scalar_lea.vmem %s633, %s665
              $region69: #{tpu_custom_call.1} parent=63 // loop_footer
                %s647 = sadd.s32 %s645, 1
              $region70: #{tpu_custom_call.1} parent=63 // loop_footer_branch
                %644 = sbr.rel target = $region66
              $region71: #{tpu_custom_call.1} parent=63 // loop_exit
                _
              %s668 = sshrl.u32 %s629, 2
              %s669 = sand.u32 %s629, 3
              %s670 = smul.u32 %s668, 4
              %s671 = smul.u32 8, %s670
              %s672 = scalar_lea.vmem %s622, %s671 [#allocation7]
              %s673 = smul.u32 8, %s670
              %s674 = scalar_lea.vmem %s633, %s673
              // While loop
              $region72: #{tpu_custom_call.1} parent=63 // loop_pre_header
                _
              $region73: #{tpu_custom_call.1} parent=63 // loop_header
                %s676 = sphi 0, %s678
                %p677 = scmp.ge.s32.totalorder %s676, %s669
                %s681 = sphi 0, %s688
                %s682 = sphi %s672, %s691
                %s683 = sphi %s674, %s692
              $region74: #{tpu_custom_call.1} parent=63 // loop_header_branch
                %680 = sbr.rel (%p677) target = $region78
              $region75: #{tpu_custom_call.1} parent=63 // loop_body
                %v684 = vld [vmem:[%s682] sm:%s642]
                %685 = vst [vmem:[%s683] sm:%s642] %v684
                %s686 = sadd.s32 1, %s681
                %p687 = scmp.ge.s32.totalorder %s686, %s669
                %s688 = scalar_select %p687, 0, %s686
                %s689 = smul.u32 %s688, 8
                %s690 = smul.u32 %s688, 8
                %s691 = scalar_lea.vmem %s672, %s689 [#allocation7]
                %s692 = scalar_lea.vmem %s674, %s690
              $region76: #{tpu_custom_call.1} parent=63 // loop_footer
                %s678 = sadd.s32 %s676, 1
              $region77: #{tpu_custom_call.1} parent=63 // loop_footer_branch
                %675 = sbr.rel target = $region73
              $region78: #{tpu_custom_call.1} parent=63 // loop_exit
                _
            $region64: #{tpu_custom_call.1} parent=55 // pred_fallthru
              _
          $region56: #{tpu_custom_call.1} parent=51 // pred_fallthru
            _
          %747 = vnop
        $region52: #{tpu_custom_call.1} parent=39 // pred_fallthru
          _
      $region40: #{tpu_custom_call.1} parent=5 // pred_fallthru
        _
      %p748 = scmp.le.s32.totalorder 2, %s17
      // Predicated region
      $region101: #{tpu_custom_call.1} parent=5 // pred_check
        %p749 = pneg %p748
      $region102: #{tpu_custom_call.1} parent=5 // pred_check_branch
        %751 = sbr.rel (%p749) target = $region104
      $region103: #{tpu_custom_call.1} parent=5 // pred_region
        %s752 = ssub.s32 %s17, 2
        // Predicated region
        $region105: #{tpu_custom_call.1} parent=103 // pred_check
          %p753 = pneg %p156
        $region106: #{tpu_custom_call.1} parent=103 // pred_check_branch
          %755 = sbr.rel (%p753) target = $region108
        $region107: #{tpu_custom_call.1} parent=103 // pred_region
          %s756 = sand.u32 %s141, 1
          %s757 = sand.u32 %s141, 1
          %s758 = smul.addr %s757, 32
          %s759 = scalar_lea.vmem [#allocation7], %s758
        $region108: #{tpu_custom_call.1} parent=103 // pred_fallthru
          _
      $region104: #{tpu_custom_call.1} parent=5 // pred_fallthru
        _
    $region6: #{tpu_custom_call.1} parent=1 // loop_footer
      %s21 = sadd.s32 1, %s17
    $region7: #{tpu_custom_call.1} parent=1 // loop_footer_branch
      %16 = sbr.rel target = $region3
    $region8: #{tpu_custom_call.1} parent=1 // loop_exit
      _
    %760 = vsyncpa [#allocation4], 1
    %s761 = scalar_lea.sflag [#allocation4], 1
    %762 = vsyncpa %s761, 1
    %763 = vsyncpa [#allocation6], 1

</llo_original>
